<compile_context>
chip_gen: v7x
topology: tpu7x:2x2x1
jax: 0.10.0
libtpu: 0.0.40
codegen_flags: <defaults>
</compile_context>

<pallas_src>
import jax
import jax.numpy as jnp
from jax.experimental import pallas as pl
from jax.experimental.pallas import tpu as pltpu

F_IN = 29        # true input features
F_PAD = 32       # padded (lane/tile friendly) input features
H1, H2, H3, H4 = 64, 128, 128, 32


def _round_up(x, m):
    return pl.cdiv(x, m) * m


def mlp_kernel(x_ref,
               w1_ref, b1_ref,
               w2_ref, b2_ref,
               w3_ref, b3_ref,
               w4_ref, b4_ref,
               w5_ref, b5_ref,
               o_ref):
    # x tile: (TILE_B, 32) f32 -> bf16 MXU operand; all matmuls accumulate in f32.
    h = x_ref[...].astype(jnp.bfloat16)

    h = jnp.dot(h, w1_ref[...], preferred_element_type=jnp.float32) + b1_ref[...]
    h = jnp.maximum(h, 0.0).astype(jnp.bfloat16)

    h = jnp.dot(h, w2_ref[...], preferred_element_type=jnp.float32) + b2_ref[...]
    h = jnp.maximum(h, 0.0).astype(jnp.bfloat16)

    h = jnp.dot(h, w3_ref[...], preferred_element_type=jnp.float32) + b3_ref[...]
    h = jnp.maximum(h, 0.0).astype(jnp.bfloat16)

    h = jnp.dot(h, w4_ref[...], preferred_element_type=jnp.float32) + b4_ref[...]
    h = jnp.maximum(h, 0.0)                      # keep f32 for the VPU path below

    # Output layer has a single column: do it off the MXU.
    # (TILE_B, 32) * (1, 32) -> sum over lanes -> (TILE_B, 1)
    z = jnp.sum(h * w5_ref[...], axis=-1, keepdims=True) + b5_ref[...]
    o_ref[...] = jax.nn.sigmoid(z).astype(o_ref.dtype)


def neural_network_net(x, params, *, tile_b=512):
    """x: (B, 29) float32 -> (B, 1) float32.

    params: ((w1,b1),...,(w5,b5)) with weights stored as (in_features, out_features)
    and biases as (1, out_features), all float32.
    """
    (w1, b1), (w2, b2), (w3, b3), (w4, b4), (w5, b5) = params
    B = x.shape[0]

    # ---- host-side layout prep -------------------------------------------------
    # Pad features 29 -> 32 with zeros.
    x = jnp.pad(x.astype(jnp.float32), ((0, 0), (0, F_PAD - x.shape[1])))

    # Choose a batch tile (multiple of 8 sublanes) and pad B up to a whole number
    # of tiles; padded rows are garbage and sliced off at the end.
    tile_b = int(max(8, min(tile_b, _round_up(B, 8))))
    tile_b = int(_round_up(tile_b, 8))
    b_pad = int(_round_up(B, tile_b))
    if b_pad != B:
        x = jnp.pad(x, ((0, b_pad - B), (0, 0)))
    grid = (b_pad // tile_b,)

    # bf16 MXU operands; biases stay f32. w1 zero-padded on K to match x padding.
    w1p = jnp.pad(w1, ((0, F_PAD - w1.shape[0]), (0, 0))).astype(jnp.bfloat16)
    w2b = w2.astype(jnp.bfloat16)
    w3b = w3.astype(jnp.bfloat16)
    w4b = w4.astype(jnp.bfloat16)
    w5r = w5.reshape(1, H4).astype(jnp.float32)   # (32,1) -> (1,32) row for the VPU reduction

    # ---- specs -------------------------------------------------------------------
    const = lambda shape: pl.BlockSpec(shape, lambda i: (0, 0))   # resident across grid steps
    in_specs = [
        pl.BlockSpec((tile_b, F_PAD), lambda i: (i, 0)),          # x tile (pipelined)
        const((F_PAD, H1)), const((1, H1)),
        const((H1, H2)),    const((1, H2)),
        const((H2, H3)),    const((1, H3)),
        const((H3, H4)),    const((1, H4)),
        const((1, H4)),     const((1, 1)),
    ]
    out_spec = pl.BlockSpec((tile_b, 1), lambda i: (i, 0))

    flops = 2 * b_pad * (F_PAD * H1 + H1 * H2 + H2 * H3 + H3 * H4 + H4)
    weight_bytes = (w1p.size + w2b.size + w3b.size + w4b.size) * 2 + (w5r.size + 4 * (H1 + H2 + H3 + H4) + 1) * 4
    cost = pl.CostEstimate(
        flops=int(flops),
        transcendentals=int(b_pad),
        bytes_accessed=int(b_pad * F_PAD * 4 + b_pad * 4 + weight_bytes),
    )

    out = pl.pallas_call(
        mlp_kernel,
        out_shape=jax.ShapeDtypeStruct((b_pad, 1), jnp.float32),
        grid_spec=pltpu.PrefetchScalarGridSpec(
            num_scalar_prefetch=0,
            grid=grid,
            in_specs=in_specs,
            out_specs=out_spec,
        ),
        compiler_params=pltpu.CompilerParams(
            dimension_semantics=("parallel",),
        ),
        cost_estimate=cost,
    )(x, w1p, b1, w2b, b2, w3b, b3, w4b, b4, w5r, b5)

    return out[:B]


def init_linear(key, fan_in, fan_out):
    """Mimic PyTorch nn.Linear default init (uniform +-1/sqrt(fan_in)).
    Weight stored transposed as (fan_in, fan_out); bias as (1, fan_out)."""
    kw, kb = jax.random.split(key)
    bound = 1.0 / jnp.sqrt(jnp.float32(fan_in))
    w = jax.random.uniform(kw, (fan_in, fan_out), jnp.float32, -bound, bound)
    b = jax.random.uniform(kb, (1, fan_out), jnp.float32, -bound, bound)
    return w, b


def ref_forward(x, params):
    """Pure-JAX reference mirroring the kernel's bf16-operand / f32-accumulate math."""
    (w1, b1), (w2, b2), (w3, b3), (w4, b4), (w5, b5) = params
    h = x.astype(jnp.float32)
    for (w, b) in ((w1, b1), (w2, b2), (w3, b3), (w4, b4)):
        h = jnp.dot(h.astype(jnp.bfloat16), w.astype(jnp.bfloat16),
                    preferred_element_type=jnp.float32) + b
        h = jnp.maximum(h, 0.0)
    z = jnp.dot(h, w5, preferred_element_type=jnp.float32) + b5
    return jax.nn.sigmoid(z)


if __name__ == "__main__":
    key = jax.random.PRNGKey(0)
    k_x, k_x2, k1, k2, k3, k4, k5 = jax.random.split(key, 7)

    params = (
        init_linear(k1, F_IN, H1),
        init_linear(k2, H1, H2),
        init_linear(k3, H2, H3),
        init_linear(k4, H3, H4),
        init_linear(k5, H4, 1),
    )

    # Small, single-tile case.
    B = 8
    x = jax.random.normal(k_x, (B, F_IN), jnp.float32)
    out = neural_network_net(x, params)
    jax.block_until_ready(out)
    expected = ref_forward(x, params)
    assert out.shape == (B, 1)
    assert jnp.allclose(out, expected, atol=2e-3, rtol=2e-3), (
        float(jnp.max(jnp.abs(out - expected))))

    # Multi-tile case (exercises the batch grid, resident weights and padded tail).
    B2 = 300
    x2 = jax.random.normal(k_x2, (B2, F_IN), jnp.float32)
    out2 = neural_network_net(x2, params, tile_b=128)
    jax.block_until_ready(out2)
    expected2 = ref_forward(x2, params)
    assert out2.shape == (B2, 1)
    assert jnp.allclose(out2, expected2, atol=2e-3, rtol=2e-3), (
        float(jnp.max(jnp.abs(out2 - expected2))))

    print("KERNEL_OK")
</pallas_src>

<mosaic_0001>
module attributes {stable_mosaic.version = 11 : i64} {
  func.func @mlp_kernel(%arg0: i32, %arg1: memref<8x32xf32, #tpu.memory_space<vmem>>, %arg2: memref<32x64xbf16, #tpu.memory_space<vmem>>, %arg3: memref<1x64xf32, #tpu.memory_space<vmem>>, %arg4: memref<64x128xbf16, #tpu.memory_space<vmem>>, %arg5: memref<1x128xf32, #tpu.memory_space<vmem>>, %arg6: memref<128x128xbf16, #tpu.memory_space<vmem>>, %arg7: memref<1x128xf32, #tpu.memory_space<vmem>>, %arg8: memref<128x32xbf16, #tpu.memory_space<vmem>>, %arg9: memref<1x32xf32, #tpu.memory_space<vmem>>, %arg10: memref<1x32xf32, #tpu.memory_space<vmem>>, %arg11: memref<1x1xf32, #tpu.memory_space<vmem>>, %arg12: memref<8x1xf32, #tpu.memory_space<vmem>>) attributes {dimension_semantics = [#tpu.dimension_semantics<parallel>], iteration_bounds = array<i64: 1>, scalar_prefetch = 0 : i64, scratch_operands = 0 : i64, tpu.core_type = #tpu.core_type<tc>, window_params = [{transform_indices = @transform_0, window_bounds = array<i64: 8, 32>}, {pipeline_mode = #tpu.pipeline_mode<synchronous>, transform_indices = @transform_1, window_bounds = array<i64: 32, 64>}, {pipeline_mode = #tpu.pipeline_mode<synchronous>, transform_indices = @transform_2, window_bounds = array<i64: 1, 64>}, {pipeline_mode = #tpu.pipeline_mode<synchronous>, transform_indices = @transform_3, window_bounds = array<i64: 64, 128>}, {pipeline_mode = #tpu.pipeline_mode<synchronous>, transform_indices = @transform_4, window_bounds = array<i64: 1, 128>}, {pipeline_mode = #tpu.pipeline_mode<synchronous>, transform_indices = @transform_5, window_bounds = array<i64: 128, 128>}, {pipeline_mode = #tpu.pipeline_mode<synchronous>, transform_indices = @transform_6, window_bounds = array<i64: 1, 128>}, {pipeline_mode = #tpu.pipeline_mode<synchronous>, transform_indices = @transform_7, window_bounds = array<i64: 128, 32>}, {pipeline_mode = #tpu.pipeline_mode<synchronous>, transform_indices = @transform_8, window_bounds = array<i64: 1, 32>}, {pipeline_mode = #tpu.pipeline_mode<synchronous>, transform_indices = @transform_9, window_bounds = array<i64: 1, 32>}, {pipeline_mode = #tpu.pipeline_mode<synchronous>, transform_indices = @transform_10, window_bounds = array<i64: 1, 1>}, {transform_indices = @transform_11, window_bounds = array<i64: 8, 1>}]} {
    %c0 = arith.constant 0 : index
    %c0_0 = arith.constant 0 : index
    %0 = vector.load %arg1[%c0, %c0_0] : memref<8x32xf32, #tpu.memory_space<vmem>>, vector<8x32xf32>
    %1 = arith.truncf %0 : vector<8x32xf32> to vector<8x32xbf16>
    %c0_1 = arith.constant 0 : index
    %c0_2 = arith.constant 0 : index
    %2 = vector.load %arg2[%c0_1, %c0_2] : memref<32x64xbf16, #tpu.memory_space<vmem>>, vector<32x64xbf16>
    %cst = arith.constant dense<0.000000e+00> : vector<8x64xf32>
    %3 = tpu.matmul %1, %2, %cst {dimension_numbers = #tpu.dot_dimension_numbers<[1], [0], [0], [1], [0, 0, 1, 1], [], []>} : vector<8x32xbf16>, vector<32x64xbf16>, vector<8x64xf32> -> vector<8x64xf32>
    %c0_3 = arith.constant 0 : index
    %c0_4 = arith.constant 0 : index
    %4 = vector.load %arg3[%c0_3, %c0_4] : memref<1x64xf32, #tpu.memory_space<vmem>>, vector<1x64xf32>
    %5 = vector.broadcast %4 : vector<1x64xf32> to vector<8x64xf32>
    %6 = arith.addf %3, %5 : vector<8x64xf32>
    %cst_5 = arith.constant 0.000000e+00 : f32
    %7 = vector.broadcast %cst_5 : f32 to vector<8x64xf32>
    %8 = arith.maximumf %6, %7 : vector<8x64xf32>
    %9 = arith.truncf %8 : vector<8x64xf32> to vector<8x64xbf16>
    %c0_6 = arith.constant 0 : index
    %c0_7 = arith.constant 0 : index
    %10 = vector.load %arg4[%c0_6, %c0_7] : memref<64x128xbf16, #tpu.memory_space<vmem>>, vector<64x128xbf16>
    %cst_8 = arith.constant dense<0.000000e+00> : vector<8x128xf32>
    %11 = tpu.matmul %9, %10, %cst_8 {dimension_numbers = #tpu.dot_dimension_numbers<[1], [0], [0], [1], [0, 0, 1, 1], [], []>} : vector<8x64xbf16>, vector<64x128xbf16>, vector<8x128xf32> -> vector<8x128xf32>
    %c0_9 = arith.constant 0 : index
    %c0_10 = arith.constant 0 : index
    %12 = vector.load %arg5[%c0_9, %c0_10] : memref<1x128xf32, #tpu.memory_space<vmem>>, vector<1x128xf32>
    %13 = vector.broadcast %12 : vector<1x128xf32> to vector<8x128xf32>
    %14 = arith.addf %11, %13 : vector<8x128xf32>
    %cst_11 = arith.constant 0.000000e+00 : f32
    %15 = vector.broadcast %cst_11 : f32 to vector<8x128xf32>
    %16 = arith.maximumf %14, %15 : vector<8x128xf32>
    %17 = arith.truncf %16 : vector<8x128xf32> to vector<8x128xbf16>
    %c0_12 = arith.constant 0 : index
    %c0_13 = arith.constant 0 : index
    %18 = vector.load %arg6[%c0_12, %c0_13] : memref<128x128xbf16, #tpu.memory_space<vmem>>, vector<128x128xbf16>
    %cst_14 = arith.constant dense<0.000000e+00> : vector<8x128xf32>
    %19 = tpu.matmul %17, %18, %cst_14 {dimension_numbers = #tpu.dot_dimension_numbers<[1], [0], [0], [1], [0, 0, 1, 1], [], []>} : vector<8x128xbf16>, vector<128x128xbf16>, vector<8x128xf32> -> vector<8x128xf32>
    %c0_15 = arith.constant 0 : index
    %c0_16 = arith.constant 0 : index
    %20 = vector.load %arg7[%c0_15, %c0_16] : memref<1x128xf32, #tpu.memory_space<vmem>>, vector<1x128xf32>
    %21 = vector.broadcast %20 : vector<1x128xf32> to vector<8x128xf32>
    %22 = arith.addf %19, %21 : vector<8x128xf32>
    %cst_17 = arith.constant 0.000000e+00 : f32
    %23 = vector.broadcast %cst_17 : f32 to vector<8x128xf32>
    %24 = arith.maximumf %22, %23 : vector<8x128xf32>
    %25 = arith.truncf %24 : vector<8x128xf32> to vector<8x128xbf16>
    %c0_18 = arith.constant 0 : index
    %c0_19 = arith.constant 0 : index
    %26 = vector.load %arg8[%c0_18, %c0_19] : memref<128x32xbf16, #tpu.memory_space<vmem>>, vector<128x32xbf16>
    %cst_20 = arith.constant dense<0.000000e+00> : vector<8x32xf32>
    %27 = tpu.matmul %25, %26, %cst_20 {dimension_numbers = #tpu.dot_dimension_numbers<[1], [0], [0], [1], [0, 0, 1, 1], [], []>} : vector<8x128xbf16>, vector<128x32xbf16>, vector<8x32xf32> -> vector<8x32xf32>
    %c0_21 = arith.constant 0 : index
    %c0_22 = arith.constant 0 : index
    %28 = vector.load %arg9[%c0_21, %c0_22] : memref<1x32xf32, #tpu.memory_space<vmem>>, vector<1x32xf32>
    %29 = vector.broadcast %28 : vector<1x32xf32> to vector<8x32xf32>
    %30 = arith.addf %27, %29 : vector<8x32xf32>
    %cst_23 = arith.constant 0.000000e+00 : f32
    %31 = vector.broadcast %cst_23 : f32 to vector<8x32xf32>
    %32 = arith.maximumf %30, %31 : vector<8x32xf32>
    %c0_24 = arith.constant 0 : index
    %c0_25 = arith.constant 0 : index
    %33 = vector.load %arg10[%c0_24, %c0_25] : memref<1x32xf32, #tpu.memory_space<vmem>>, vector<1x32xf32>
    %34 = vector.broadcast %33 : vector<1x32xf32> to vector<8x32xf32>
    %35 = arith.mulf %32, %34 : vector<8x32xf32>
    %cst_26 = arith.constant dense<0.000000e+00> : vector<8xf32>
    %36 = vector.multi_reduction <add>, %35, %cst_26 [1] : vector<8x32xf32> to vector<8xf32>
    %37 = vector.shape_cast %36 : vector<8xf32> to vector<8x1xf32>
    %c0_27 = arith.constant 0 : index
    %c0_28 = arith.constant 0 : index
    %38 = vector.load %arg11[%c0_27, %c0_28] : memref<1x1xf32, #tpu.memory_space<vmem>>, vector<1x1xf32>
    %39 = vector.broadcast %38 : vector<1x1xf32> to vector<8x1xf32>
    %40 = arith.addf %37, %39 : vector<8x1xf32>
    %41 = arith.negf %40 : vector<8x1xf32>
    %42 = math.exp %41 : vector<8x1xf32>
    %cst_29 = arith.constant 1.000000e+00 : f32
    %43 = vector.broadcast %cst_29 : f32 to vector<8x1xf32>
    %44 = arith.addf %43, %42 : vector<8x1xf32>
    %45 = arith.divf %43, %44 : vector<8x1xf32>
    %c0_30 = arith.constant 0 : index
    %c0_31 = arith.constant 0 : index
    %46 = vector.load %arg12[%c0_30, %c0_31] : memref<8x1xf32, #tpu.memory_space<vmem>>, vector<8x1xf32>
    tpu.vector_store %arg12[%c0_30, %c0_31], %45 {strides = array<i32>} : memref<8x1xf32, #tpu.memory_space<vmem>>, vector<8x1xf32>,
    return
  }
  func.func @transform_0(%arg0: i32) -> (i32, i32) {
    %c0_i32 = arith.constant 0 : i32
    %c0_i32_0 = arith.constant 0 : i32
    return %arg0, %c0_i32 : i32, i32
  }
  func.func @transform_1(%arg0: i32) -> (i32, i32) {
    %c0_i32 = arith.constant 0 : i32
    %c0_i32_0 = arith.constant 0 : i32
    %c0_i32_1 = arith.constant 0 : i32
    return %c0_i32, %c0_i32_0 : i32, i32
  }
  func.func @transform_2(%arg0: i32) -> (i32, i32) {
    %c0_i32 = arith.constant 0 : i32
    %c0_i32_0 = arith.constant 0 : i32
    %c0_i32_1 = arith.constant 0 : i32
    return %c0_i32, %c0_i32_0 : i32, i32
  }
  func.func @transform_3(%arg0: i32) -> (i32, i32) {
    %c0_i32 = arith.constant 0 : i32
    %c0_i32_0 = arith.constant 0 : i32
    %c0_i32_1 = arith.constant 0 : i32
    return %c0_i32, %c0_i32_0 : i32, i32
  }
  func.func @transform_4(%arg0: i32) -> (i32, i32) {
    %c0_i32 = arith.constant 0 : i32
    %c0_i32_0 = arith.constant 0 : i32
    %c0_i32_1 = arith.constant 0 : i32
    return %c0_i32, %c0_i32_0 : i32, i32
  }
  func.func @transform_5(%arg0: i32) -> (i32, i32) {
    %c0_i32 = arith.constant 0 : i32
    %c0_i32_0 = arith.constant 0 : i32
    %c0_i32_1 = arith.constant 0 : i32
    return %c0_i32, %c0_i32_0 : i32, i32
  }
  func.func @transform_6(%arg0: i32) -> (i32, i32) {
    %c0_i32 = arith.constant 0 : i32
    %c0_i32_0 = arith.constant 0 : i32
    %c0_i32_1 = arith.constant 0 : i32
    return %c0_i32, %c0_i32_0 : i32, i32
  }
  func.func @transform_7(%arg0: i32) -> (i32, i32) {
    %c0_i32 = arith.constant 0 : i32
    %c0_i32_0 = arith.constant 0 : i32
    %c0_i32_1 = arith.constant 0 : i32
    return %c0_i32, %c0_i32_0 : i32, i32
  }
  func.func @transform_8(%arg0: i32) -> (i32, i32) {
    %c0_i32 = arith.constant 0 : i32
    %c0_i32_0 = arith.constant 0 : i32
    %c0_i32_1 = arith.constant 0 : i32
    return %c0_i32, %c0_i32_0 : i32, i32
  }
  func.func @transform_9(%arg0: i32) -> (i32, i32) {
    %c0_i32 = arith.constant 0 : i32
    %c0_i32_0 = arith.constant 0 : i32
    %c0_i32_1 = arith.constant 0 : i32
    return %c0_i32, %c0_i32_0 : i32, i32
  }
  func.func @transform_10(%arg0: i32) -> (i32, i32) {
    %c0_i32 = arith.constant 0 : i32
    %c0_i32_0 = arith.constant 0 : i32
    %c0_i32_1 = arith.constant 0 : i32
    return %c0_i32, %c0_i32_0 : i32, i32
  }
  func.func @transform_11(%arg0: i32) -> (i32, i32) {
    %c0_i32 = arith.constant 0 : i32
    %c0_i32_0 = arith.constant 0 : i32
    return %arg0, %c0_i32 : i32, i32
  }
}

</mosaic_0001>

<llo_original>
// kernel: tpu_custom_call.1
$region0: #{tpu_custom_call.1}
  #allocation0 [shape = 'u32[]', space=smem, size = 0x4, offset = 0x4, fixed_abs, tag = 'smem constant byte address 0x4 - core index']
  #allocation1 [shape = 'u32[144,128]{1,0:T(1,128)}', space=vmem, size = 0x12000, scoped, tag = 'internal scratch']
  #allocation2 [shape = 'f32[1,1]{1,0:T(1,128)S(1)}', space=vmem, size = 0x200, scoped, tag = 'scoped memory for tpu_custom_call.1']
  %s0 = inlined_call_operand.hbm [shape: f32[8,32], index: 0, kind: input, shape index: {}]
  %s1 = inlined_call_operand.hbm [shape: bf16[32,64], index: 1, kind: input, shape index: {}]
  %s2 = inlined_call_operand.vmem [shape: f32[1,64], index: 2, kind: input, shape index: {}]
  %s3 = inlined_call_operand.vmem [shape: bf16[64,128], index: 3, kind: input, shape index: {}]
  %s4 = inlined_call_operand.vmem [shape: f32[1,128], index: 4, kind: input, shape index: {}]
  %s5 = inlined_call_operand.vmem [shape: bf16[128,128], index: 5, kind: input, shape index: {}]
  %s6 = inlined_call_operand.vmem [shape: f32[1,128], index: 6, kind: input, shape index: {}]
  %s7 = inlined_call_operand.vmem [shape: bf16[128,32], index: 7, kind: input, shape index: {}]
  %s8 = inlined_call_operand.vmem [shape: f32[1,32], index: 8, kind: input, shape index: {}]
  %s9 = inlined_call_operand.vmem [shape: f32[1,32], index: 9, kind: input, shape index: {}]
  %s10 = inlined_call_operand.<no memory space> [shape: f32[1,1], index: 10, kind: input, shape index: {}]
  %s11 = inlined_call_operand.vmem [shape: f32[8,1], index: 11, kind: output, shape index: {}]
  %s12 = sld [smem:[#allocation0]]
  $region62: #{tpu_custom_call.1} parent=0
    _
  %s14 = ssub.s32 1, %s12
  %s15 = scalar_select 0, %s14, %s12
  %v16 = vstv %s10
  %17 = vst [vmem:[#allocation2] sm:$0x1] %v16
  $region1: #{tpu_custom_call.1} parent=0
    #allocation3 [shape = 'u8[4096]{0}', space=vmem, size = 0x1000, scoped, tag = 'input window, operand 0, single buffered']
    #allocation4 [shape = 's32[1]{0}', space=sflag, size = 0x4, scoped, tag = 'scoped memory for tpu_custom_call.1']
    #allocation5 [shape = 'u8[8192]{0}', space=vmem, size = 0x2000, scoped, tag = 'input window, operand 1, single buffered']
    #allocation6 [shape = 's32[1]{0}', space=sflag, size = 0x4, scoped, tag = 'scoped memory for tpu_custom_call.1']
    %18 = vsyncpa [#allocation4], 0
    %19 = vsyncpa [#allocation6], 0
    // Predicated region
    $region2: #{tpu_custom_call.1} parent=1 // pred_check
      _
    $region3: #{tpu_custom_call.1} parent=1 // pred_check_branch
      %21 = sbr.rel (0) target = $region5
    $region4: #{tpu_custom_call.1} parent=1 // pred_region
      %s23 = ssub.s32 128, 128
      %24 = vsyncadd [#allocation4], %s23
      %s26 = sshll.u32 [#allocation3], 4
      %s27 = int_to_ptr.vmem [resolvable:$true] %s26
      %29 = dma.hbm_to_vmem [thread:$0]  %s0, 128, %s27, [#allocation4]
    $region5: #{tpu_custom_call.1} parent=1 // pred_fallthru
      _
    // Predicated region
    $region6: #{tpu_custom_call.1} parent=1 // pred_check
      _
    $region7: #{tpu_custom_call.1} parent=1 // pred_check_branch
      %31 = sbr.rel (0) target = $region9
    $region8: #{tpu_custom_call.1} parent=1 // pred_region
      %s33 = ssub.s32 256, 256
      %34 = vsyncadd [#allocation6], %s33
      %s35 = sshll.u32 [#allocation5], 4
      %s36 = int_to_ptr.vmem [resolvable:$true] %s35
      %41 = dma.hbm_to_vmem [thread:$0]  %s1, 256, %s36, [#allocation6], 64, 64, 4
    $region9: #{tpu_custom_call.1} parent=1 // pred_fallthru
      _
    // Predicated region
    $region10: #{tpu_custom_call.1} parent=1 // pred_check
      _
    $region11: #{tpu_custom_call.1} parent=1 // pred_check_branch
      %43 = sbr.rel (0) target = $region13
    $region12: #{tpu_custom_call.1} parent=1 // pred_region
      _
    $region13: #{tpu_custom_call.1} parent=1 // pred_fallthru
      _
    // Predicated region
    $region14: #{tpu_custom_call.1} parent=1 // pred_check
      _
    $region15: #{tpu_custom_call.1} parent=1 // pred_check_branch
      %45 = sbr.rel (0) target = $region17
    $region16: #{tpu_custom_call.1} parent=1 // pred_region
      _
    $region17: #{tpu_custom_call.1} parent=1 // pred_fallthru
      _
    // Predicated region
    $region18: #{tpu_custom_call.1} parent=1 // pred_check
      _
    $region19: #{tpu_custom_call.1} parent=1 // pred_check_branch
      %47 = sbr.rel (0) target = $region21
    $region20: #{tpu_custom_call.1} parent=1 // pred_region
      _
    $region21: #{tpu_custom_call.1} parent=1 // pred_fallthru
      _
    // Predicated region
    $region22: #{tpu_custom_call.1} parent=1 // pred_check
      _
    $region23: #{tpu_custom_call.1} parent=1 // pred_check_branch
      %49 = sbr.rel (0) target = $region25
    $region24: #{tpu_custom_call.1} parent=1 // pred_region
      _
    $region25: #{tpu_custom_call.1} parent=1 // pred_fallthru
      _
    // Predicated region
    $region26: #{tpu_custom_call.1} parent=1 // pred_check
      _
    $region27: #{tpu_custom_call.1} parent=1 // pred_check_branch
      %51 = sbr.rel (0) target = $region29
    $region28: #{tpu_custom_call.1} parent=1 // pred_region
      _
    $region29: #{tpu_custom_call.1} parent=1 // pred_fallthru
      _
    // Predicated region
    $region30: #{tpu_custom_call.1} parent=1 // pred_check
      _
    $region31: #{tpu_custom_call.1} parent=1 // pred_check_branch
      %53 = sbr.rel (0) target = $region33
    $region32: #{tpu_custom_call.1} parent=1 // pred_region
      _
    $region33: #{tpu_custom_call.1} parent=1 // pred_fallthru
      _
    // Predicated region
    $region34: #{tpu_custom_call.1} parent=1 // pred_check
      _
    $region35: #{tpu_custom_call.1} parent=1 // pred_check_branch
      %55 = sbr.rel (0) target = $region37
    $region36: #{tpu_custom_call.1} parent=1 // pred_region
      _
    $region37: #{tpu_custom_call.1} parent=1 // pred_fallthru
      _
    // Predicated region
    $region38: #{tpu_custom_call.1} parent=1 // pred_check
      _
    $region39: #{tpu_custom_call.1} parent=1 // pred_check_branch
      %57 = sbr.rel (0) target = $region41
    $region40: #{tpu_custom_call.1} parent=1 // pred_region
      _
    $region41: #{tpu_custom_call.1} parent=1 // pred_fallthru
      _
    // Predicated region
    $region42: #{tpu_custom_call.1} parent=1 // pred_check
      _
    $region43: #{tpu_custom_call.1} parent=1 // pred_check_branch
      %59 = sbr.rel (0) target = $region45
    $region44: #{tpu_custom_call.1} parent=1 // pred_region
      _
    $region45: #{tpu_custom_call.1} parent=1 // pred_fallthru
      _
    // Predicated region
    $region46: #{tpu_custom_call.1} parent=1 // pred_check
      _
    $region47: #{tpu_custom_call.1} parent=1 // pred_check_branch
      %61 = sbr.rel (0) target = $region49
    $region48: #{tpu_custom_call.1} parent=1 // pred_region
      %62 = dma.done [#allocation4], 128
    $region49: #{tpu_custom_call.1} parent=1 // pred_fallthru
      _
    // Predicated region
    $region50: #{tpu_custom_call.1} parent=1 // pred_check
      _
    $region51: #{tpu_custom_call.1} parent=1 // pred_check_branch
      %64 = sbr.rel (0) target = $region53
    $region52: #{tpu_custom_call.1} parent=1 // pred_region
      %65 = dma.done [#allocation6], 256
    $region53: #{tpu_custom_call.1} parent=1 // pred_fallthru
      _
    %v67 = vld [vmem:[#allocation3] sm:$0xff]
    %v68 = vpack.c.bf16 %v67, %v67
    %v69 = vld [vmem:[#allocation5] sm:$0xf]
    %v70 = vld [vmem:[#allocation5 + $0x4] sm:$0xf]
    %v71 = vld [vmem:[#allocation5 + $0x8] sm:$0xf]
    %v72 = vld [vmem:[#allocation5 + $0xc] sm:$0xf]
    %v73 = vld [vmem:[%s2] sm:$0x1]
    %v75 = vlaneseq
    %v76 = vshrl.u32 %v75, 7
    %v77 = vsub.s32 0, %v76
    %v78 = vrot.slane %v73, %v77
    %v84 = vunpack.c.l.b16 %v69
    %v85 = vunpack.c.l.b16 %v70
    %v86 = vunpack.c.l.b16 %v71
    %v87 = vunpack.c.l.b16 %v72
    %v88 = vpack.c.b16 %v85, %v84
    %v89 = vpack.c.b16 %v87, %v86
    %vm92 = vcmask 261120
    %v94 = vsel %vm92, %v68, 0
    %96 = vmatprep.subr.bf16.mxu0 0
    %97 = vmatpush1.bf16.msra.mxu0 %v88
    %98 = vmatprep.subr.bf16.mxu0 0
    %99 = vmatpush1.bf16.msra.mxu0 %v89
    %100 = vmatprep.subr.bf16.mxu0 0
    %101 = vmatpush1.bf16.msra.mxu0 0
    %102 = vmatprep.subr.bf16.mxu0 0
    %103 = vmatpush1.bf16.msra.mxu0 0
    %104 = vmatprep.subr.bf16.mxu0 0
    %105 = vmatpush1.bf16.msra.mxu0 0
    %106 = vmatprep.subr.bf16.mxu0 0
    %107 = vmatpush1.bf16.msra.mxu0 0
    %108 = vmatprep.subr.bf16.mxu0 0
    %109 = vmatpush1.bf16.msra.mxu0 0
    %110 = vmatprep.subr.bf16.mxu0 0
    %111 = vmatpush1.bf16.msra.mxu0 0
    %112 = vmatprep.subr.bf16.mxu0 0
    %113 = vmatpush1.bf16.msra.mxu0 0
    %114 = vmatprep.subr.bf16.mxu0 0
    %115 = vmatpush1.bf16.msra.mxu0 0
    %116 = vmatprep.subr.bf16.mxu0 0
    %117 = vmatpush1.bf16.msra.mxu0 0
    %118 = vmatprep.subr.bf16.mxu0 0
    %119 = vmatpush1.bf16.msra.mxu0 0
    %120 = vmatprep.subr.bf16.mxu0 0
    %121 = vmatpush1.bf16.msra.mxu0 0
    %122 = vmatprep.subr.bf16.mxu0 0
    %123 = vmatpush1.bf16.msra.mxu0 0
    %124 = vmatprep.subr.bf16.mxu0 0
    %125 = vmatpush1.bf16.msra.mxu0 0
    %126 = vmatprep.subr.bf16.mxu0 0
    %127 = vmatpush1.bf16.msra.mxu0 0
    %128 = vmatprep.mubr.bf16.mxu0 0
    %129 = vmatmul.mubr.bf16.gmra.mrb[0].mxu0 %v94
    %v130 = vpop.f32.mrb[0].mxu0
    %v131 = vadd.f32 %v78, %v130
    %v132 = vpop.f32.mrb[0].mxu0
    %v133 = vpop.f32.mrb[0].mxu0
    %v134 = vpop.f32.mrb[0].mxu0
    %135 = vdwg.mxu0
    %v136 = vmax.f32 %v131, 0.0
    %v137 = vpack.c.bf16 %v136, %v136
    %v138 = vld [vmem:[%s3] sm:$0xf]
    %v139 = vld [vmem:[%s3 + $0x4] sm:$0xf]
    %v140 = vld [vmem:[%s3 + $0x8] sm:$0xf]
    %v141 = vld [vmem:[%s3 + $0xc] sm:$0xf]
    %v142 = vld [vmem:[%s3 + $0x10] sm:$0xf]
    %v143 = vld [vmem:[%s3 + $0x14] sm:$0xf]
    %v144 = vld [vmem:[%s3 + $0x18] sm:$0xf]
    %v145 = vld [vmem:[%s3 + $0x1c] sm:$0xf]
    %v146 = vld [vmem:[%s4] sm:$0x1]
    %v148 = vlaneseq
    %v149 = vshrl.u32 %v148, 7
    %v150 = vsub.s32 0, %v149
    %v151 = vrot.slane %v146, %v150
    %v161 = vunpack.c.l.b16 %v138
    %v162 = vunpack.c.l.b16 %v139
    %v163 = vunpack.c.l.b16 %v140
    %v164 = vunpack.c.l.b16 %v141
    %v165 = vunpack.c.l.b16 %v142
    %v166 = vunpack.c.l.b16 %v143
    %v167 = vunpack.c.l.b16 %v144
    %v168 = vunpack.c.l.b16 %v145
    %v169 = vpack.c.b16 %v162, %v161
    %v170 = vpack.c.b16 %v164, %v163
    %v171 = vpack.c.b16 %v166, %v165
    %v172 = vpack.c.b16 %v168, %v167
    %vm177 = vcmask 523264
    %v179 = vsel %vm177, %v137, 0
    %181 = vmatprep.subr.bf16.mxu0 0
    %182 = vmatpush1.bf16.msra.mxu0 %v169
    %183 = vmatprep.subr.bf16.mxu0 0
    %184 = vmatpush1.bf16.msra.mxu0 %v170
    %185 = vmatprep.subr.bf16.mxu0 0
    %186 = vmatpush1.bf16.msra.mxu0 %v171
    %187 = vmatprep.subr.bf16.mxu0 0
    %188 = vmatpush1.bf16.msra.mxu0 %v172
    %189 = vmatprep.subr.bf16.mxu0 0
    %190 = vmatpush1.bf16.msra.mxu0 0
    %191 = vmatprep.subr.bf16.mxu0 0
    %192 = vmatpush1.bf16.msra.mxu0 0
    %193 = vmatprep.subr.bf16.mxu0 0
    %194 = vmatpush1.bf16.msra.mxu0 0
    %195 = vmatprep.subr.bf16.mxu0 0
    %196 = vmatpush1.bf16.msra.mxu0 0
    %197 = vmatprep.subr.bf16.mxu0 0
    %198 = vmatpush1.bf16.msra.mxu0 0
    %199 = vmatprep.subr.bf16.mxu0 0
    %200 = vmatpush1.bf16.msra.mxu0 0
    %201 = vmatprep.subr.bf16.mxu0 0
    %202 = vmatpush1.bf16.msra.mxu0 0
    %203 = vmatprep.subr.bf16.mxu0 0
    %204 = vmatpush1.bf16.msra.mxu0 0
    %205 = vmatprep.subr.bf16.mxu0 0
    %206 = vmatpush1.bf16.msra.mxu0 0
    %207 = vmatprep.subr.bf16.mxu0 0
    %208 = vmatpush1.bf16.msra.mxu0 0
    %209 = vmatprep.subr.bf16.mxu0 0
    %210 = vmatpush1.bf16.msra.mxu0 0
    %211 = vmatprep.subr.bf16.mxu0 0
    %212 = vmatpush1.bf16.msra.mxu0 0
    %213 = vmatprep.mubr.bf16.mxu0 0
    %214 = vmatmul.mubr.bf16.gmra.mrb[0].mxu0 %v179
    %v215 = vpop.f32.mrb[0].mxu0
    %v216 = vadd.f32 %v151, %v215
    %v217 = vpop.f32.mrb[0].mxu0
    %v218 = vpop.f32.mrb[0].mxu0
    %v219 = vpop.f32.mrb[0].mxu0
    %220 = vdwg.mxu0
    %v221 = vmax.f32 %v216, 0.0
    %v222 = vpack.c.bf16 %v221, %v221
    %v223 = vld [vmem:[%s5] sm:$0xf]
    %v224 = vld [vmem:[%s5 + $0x4] sm:$0xf]
    %v225 = vld [vmem:[%s5 + $0x8] sm:$0xf]
    %v226 = vld [vmem:[%s5 + $0xc] sm:$0xf]
    %v227 = vld [vmem:[%s5 + $0x10] sm:$0xf]
    %v228 = vld [vmem:[%s5 + $0x14] sm:$0xf]
    %v229 = vld [vmem:[%s5 + $0x18] sm:$0xf]
    %v230 = vld [vmem:[%s5 + $0x1c] sm:$0xf]
    %v231 = vld [vmem:[%s5 + $0x20] sm:$0xf]
    %v232 = vld [vmem:[%s5 + $0x24] sm:$0xf]
    %v233 = vld [vmem:[%s5 + $0x28] sm:$0xf]
    %v234 = vld [vmem:[%s5 + $0x2c] sm:$0xf]
    %v235 = vld [vmem:[%s5 + $0x30] sm:$0xf]
    %v236 = vld [vmem:[%s5 + $0x34] sm:$0xf]
    %v237 = vld [vmem:[%s5 + $0x38] sm:$0xf]
    %v238 = vld [vmem:[%s5 + $0x3c] sm:$0xf]
    %v239 = vld [vmem:[%s6] sm:$0x1]
    %v241 = vlaneseq
    %v242 = vshrl.u32 %v241, 7
    %v243 = vsub.s32 0, %v242
    %v244 = vrot.slane %v239, %v243
    %v262 = vunpack.c.l.b16 %v223
    %v263 = vunpack.c.l.b16 %v224
    %v264 = vunpack.c.l.b16 %v225
    %v265 = vunpack.c.l.b16 %v226
    %v266 = vunpack.c.l.b16 %v227
    %v267 = vunpack.c.l.b16 %v228
    %v268 = vunpack.c.l.b16 %v229
    %v269 = vunpack.c.l.b16 %v230
    %v270 = vunpack.c.l.b16 %v231
    %v271 = vunpack.c.l.b16 %v232
    %v272 = vunpack.c.l.b16 %v233
    %v273 = vunpack.c.l.b16 %v234
    %v274 = vunpack.c.l.b16 %v235
    %v275 = vunpack.c.l.b16 %v236
    %v276 = vunpack.c.l.b16 %v237
    %v277 = vunpack.c.l.b16 %v238
    %v278 = vpack.c.b16 %v263, %v262
    %v279 = vpack.c.b16 %v265, %v264
    %v280 = vpack.c.b16 %v267, %v266
    %v281 = vpack.c.b16 %v269, %v268
    %v282 = vpack.c.b16 %v271, %v270
    %v283 = vpack.c.b16 %v273, %v272
    %v284 = vpack.c.b16 %v275, %v274
    %v285 = vpack.c.b16 %v277, %v276
    %294 = vmatprep.subr.bf16.mxu0 0
    %295 = vmatpush1.bf16.msra.mxu0 %v278
    %296 = vmatprep.subr.bf16.mxu0 0
    %297 = vmatpush1.bf16.msra.mxu0 %v279
    %298 = vmatprep.subr.bf16.mxu0 0
    %299 = vmatpush1.bf16.msra.mxu0 %v280
    %300 = vmatprep.subr.bf16.mxu0 0
    %301 = vmatpush1.bf16.msra.mxu0 %v281
    %302 = vmatprep.subr.bf16.mxu0 0
    %303 = vmatpush1.bf16.msra.mxu0 %v282
    %304 = vmatprep.subr.bf16.mxu0 0
    %305 = vmatpush1.bf16.msra.mxu0 %v283
    %306 = vmatprep.subr.bf16.mxu0 0
    %307 = vmatpush1.bf16.msra.mxu0 %v284
    %308 = vmatprep.subr.bf16.mxu0 0
    %309 = vmatpush1.bf16.msra.mxu0 %v285
    %310 = vmatprep.subr.bf16.mxu0 0
    %311 = vmatpush1.bf16.msra.mxu0 0
    %312 = vmatprep.subr.bf16.mxu0 0
    %313 = vmatpush1.bf16.msra.mxu0 0
    %314 = vmatprep.subr.bf16.mxu0 0
    %315 = vmatpush1.bf16.msra.mxu0 0
    %316 = vmatprep.subr.bf16.mxu0 0
    %317 = vmatpush1.bf16.msra.mxu0 0
    %318 = vmatprep.subr.bf16.mxu0 0
    %319 = vmatpush1.bf16.msra.mxu0 0
    %320 = vmatprep.subr.bf16.mxu0 0
    %321 = vmatpush1.bf16.msra.mxu0 0
    %322 = vmatprep.subr.bf16.mxu0 0
    %323 = vmatpush1.bf16.msra.mxu0 0
    %324 = vmatprep.subr.bf16.mxu0 0
    %325 = vmatpush1.bf16.msra.mxu0 0
    %326 = vmatprep.mubr.bf16.mxu0 0
    %327 = vmatmul.mubr.bf16.gmra.mrb[0].mxu0 %v222
    %v328 = vpop.f32.mrb[0].mxu0
    %v329 = vadd.f32 %v244, %v328
    %v330 = vpop.f32.mrb[0].mxu0
    %v331 = vpop.f32.mrb[0].mxu0
    %v332 = vpop.f32.mrb[0].mxu0
    %333 = vdwg.mxu0
    %v334 = vmax.f32 %v329, 0.0
    %v335 = vpack.c.bf16 %v334, %v334
    %v336 = vld [vmem:[%s7] sm:$0xf]
    %v337 = vld [vmem:[%s7 + $0x4] sm:$0xf]
    %v338 = vld [vmem:[%s7 + $0x8] sm:$0xf]
    %v339 = vld [vmem:[%s7 + $0xc] sm:$0xf]
    %v340 = vld [vmem:[%s7 + $0x10] sm:$0xf]
    %v341 = vld [vmem:[%s7 + $0x14] sm:$0xf]
    %v342 = vld [vmem:[%s7 + $0x18] sm:$0xf]
    %v343 = vld [vmem:[%s7 + $0x1c] sm:$0xf]
    %v344 = vld [vmem:[%s7 + $0x20] sm:$0xf]
    %v345 = vld [vmem:[%s7 + $0x24] sm:$0xf]
    %v346 = vld [vmem:[%s7 + $0x28] sm:$0xf]
    %v347 = vld [vmem:[%s7 + $0x2c] sm:$0xf]
    %v348 = vld [vmem:[%s7 + $0x30] sm:$0xf]
    %v349 = vld [vmem:[%s7 + $0x34] sm:$0xf]
    %v350 = vld [vmem:[%s7 + $0x38] sm:$0xf]
    %v351 = vld [vmem:[%s7 + $0x3c] sm:$0xf]
    %v352 = vld [vmem:[%s8] sm:$0x1]
    %v354 = vlaneseq
    %v355 = vshrl.u32 %v354, 7
    %v356 = vsub.s32 0, %v355
    %v357 = vrot.slane %v352, %v356
    %v375 = vunpack.c.l.b16 %v336
    %v376 = vunpack.c.l.b16 %v337
    %v377 = vunpack.c.l.b16 %v338
    %v378 = vunpack.c.l.b16 %v339
    %v379 = vunpack.c.l.b16 %v340
    %v380 = vunpack.c.l.b16 %v341
    %v381 = vunpack.c.l.b16 %v342
    %v382 = vunpack.c.l.b16 %v343
    %v383 = vunpack.c.l.b16 %v344
    %v384 = vunpack.c.l.b16 %v345
    %v385 = vunpack.c.l.b16 %v346
    %v386 = vunpack.c.l.b16 %v347
    %v387 = vunpack.c.l.b16 %v348
    %v388 = vunpack.c.l.b16 %v349
    %v389 = vunpack.c.l.b16 %v350
    %v390 = vunpack.c.l.b16 %v351
    %v391 = vpack.c.b16 %v376, %v375
    %v392 = vpack.c.b16 %v378, %v377
    %v393 = vpack.c.b16 %v380, %v379
    %v394 = vpack.c.b16 %v382, %v381
    %v395 = vpack.c.b16 %v384, %v383
    %v396 = vpack.c.b16 %v386, %v385
    %v397 = vpack.c.b16 %v388, %v387
    %v398 = vpack.c.b16 %v390, %v389
    %407 = vmatprep.subr.bf16.mxu0 0
    %408 = vmatpush1.bf16.msra.mxu0 %v391
    %409 = vmatprep.subr.bf16.mxu0 0
    %410 = vmatpush1.bf16.msra.mxu0 %v392
    %411 = vmatprep.subr.bf16.mxu0 0
    %412 = vmatpush1.bf16.msra.mxu0 %v393
    %413 = vmatprep.subr.bf16.mxu0 0
    %414 = vmatpush1.bf16.msra.mxu0 %v394
    %415 = vmatprep.subr.bf16.mxu0 0
    %416 = vmatpush1.bf16.msra.mxu0 %v395
    %417 = vmatprep.subr.bf16.mxu0 0
    %418 = vmatpush1.bf16.msra.mxu0 %v396
    %419 = vmatprep.subr.bf16.mxu0 0
    %420 = vmatpush1.bf16.msra.mxu0 %v397
    %421 = vmatprep.subr.bf16.mxu0 0
    %422 = vmatpush1.bf16.msra.mxu0 %v398
    %423 = vmatprep.subr.bf16.mxu0 0
    %424 = vmatpush1.bf16.msra.mxu0 0
    %425 = vmatprep.subr.bf16.mxu0 0
    %426 = vmatpush1.bf16.msra.mxu0 0
    %427 = vmatprep.subr.bf16.mxu0 0
    %428 = vmatpush1.bf16.msra.mxu0 0
    %429 = vmatprep.subr.bf16.mxu0 0
    %430 = vmatpush1.bf16.msra.mxu0 0
    %431 = vmatprep.subr.bf16.mxu0 0
    %432 = vmatpush1.bf16.msra.mxu0 0
    %433 = vmatprep.subr.bf16.mxu0 0
    %434 = vmatpush1.bf16.msra.mxu0 0
    %435 = vmatprep.subr.bf16.mxu0 0
    %436 = vmatpush1.bf16.msra.mxu0 0
    %437 = vmatprep.subr.bf16.mxu0 0
    %438 = vmatpush1.bf16.msra.mxu0 0
    %439 = vmatprep.mubr.bf16.mxu0 0
    %440 = vmatmul.mubr.bf16.gmra.mrb[0].mxu0 %v335
    %v441 = vpop.f32.mrb[0].mxu0
    %v442 = vadd.f32 %v357, %v441
    %v443 = vpop.f32.mrb[0].mxu0
    %v444 = vpop.f32.mrb[0].mxu0
    %v445 = vpop.f32.mrb[0].mxu0
    %446 = vdwg.mxu0
    %v447 = vmax.f32 %v442, 0.0
    %v448 = vld [vmem:[%s9] sm:$0x1]
    %v450 = vlaneseq
    %v451 = vshrl.u32 %v450, 7
    %v452 = vsub.s32 0, %v451
    %v453 = vrot.slane %v448, %v452
    %v455 = vmul.f32 %v447, %v453
    %v456 = vsel %vm92, %v455, 0.0
    %457 = vadd.xlane.f32.xlu0 %v456
    %v458 = vpop.xlane.xlu0 %457
    %v459 = vld [vmem:[#allocation2] sm:$0x1]
    %v461 = vlaneseq
    %v462 = vshrl.u32 %v461, 7
    %v463 = vsub.s32 0, %v462
    %v464 = vrot.slane %v459, %v463
    %v466 = vadd.f32 %v458, %v464
    %v467 = vxor.u32 %v466, 2147483648
    %v468 = vmul.f32 %v467, 1.442695
    %v469 = vpow.pop %v468
    %v470 = vadd.f32 %v469, 1.0
    %v471 = vrcp.pop %v470
    %v472 = vmul.f32 1.0, %v471
    %vm473 = vcmask 7168
    %474 = vst.msk [vmem:[%s11] sm:$0xff] %vm473, %v472
    // Predicated region
    $region54: #{tpu_custom_call.1} parent=1 // pred_check
      _
    $region55: #{tpu_custom_call.1} parent=1 // pred_check_branch
      %476 = sbr.rel (0) target = $region57
    $region56: #{tpu_custom_call.1} parent=1 // pred_region
      _
    $region57: #{tpu_custom_call.1} parent=1 // pred_fallthru
      _
    // Predicated region
    $region58: #{tpu_custom_call.1} parent=1 // pred_check
      _
    $region59: #{tpu_custom_call.1} parent=1 // pred_check_branch
      %478 = sbr.rel (0) target = $region61
    $region60: #{tpu_custom_call.1} parent=1 // pred_region
      _
    $region61: #{tpu_custom_call.1} parent=1 // pred_fallthru
      _
    %479 = vsyncpa [#allocation4], 1
    %480 = vsyncpa [#allocation6], 1

</llo_original>
